<compile_context>
chip_gen: v6e
topology: v6e:2x2x1
jax: 0.10.0
libtpu: 0.0.40
codegen_flags: <defaults>
</compile_context>

<pallas_src>
import functools

import jax
import jax.numpy as jnp
from jax.experimental import pallas as pl
from jax.experimental.pallas import tpu as pltpu


# ----------------------------- Pallas kernels ------------------------------ #

def pool_sum_kernel(*refs, height):
    """Accumulate sum over branches + spatial tile into o_ref [1, C, 1]."""
    x_refs = refs[:height]          # each block: [1, C, T]
    o_ref = refs[height]            # block:      [1, C, 1]  (revisited over tiles)
    t = pl.program_id(1)

    @pl.when(t == 0)
    def _init():
        o_ref[...] = jnp.zeros_like(o_ref)

    partial = x_refs[0][0].astype(jnp.float32)                     # [C, T]
    for h in range(1, height):
        partial = partial + x_refs[h][0].astype(jnp.float32)
    o_ref[0] = o_ref[0] + jnp.sum(partial, axis=1, keepdims=True)  # [C, 1]


def combine_kernel(*refs, height):
    """out[b, :, tile] = sum_h attn[b, h, :] * x_h[b, :, tile]."""
    attn_ref = refs[0]              # block: [1, height, C, 1]  (tiny, resident)
    x_refs = refs[1:1 + height]     # each block: [1, C, T]
    o_ref = refs[1 + height]        # block: [1, C, T]

    a = attn_ref[0]                                                # [height, C, 1]
    acc = x_refs[0][0].astype(jnp.float32) * a[0]                  # [C, T]
    for h in range(1, height):
        acc = acc + x_refs[h][0].astype(jnp.float32) * a[h]
    o_ref[0] = acc.astype(o_ref.dtype)


# ------------------------------- wrapper ----------------------------------- #

def _choose_hw_tile(hw, c, itemsize, height, vmem_budget_bytes=8 << 20):
    """Largest multiple-of-128 tile dividing hw that keeps the pipelined
    working set ((height inputs + 1 output) x 2 buffers) under budget."""
    if hw % 128 != 0:
        return hw                      # fall back to full extent (small inputs)
    per_lane_bytes = 2 * (height + 1) * c * itemsize   # bytes per lane of tile
    max_t = max(vmem_budget_bytes // max(per_lane_bytes, 1), 128)
    t = min((max_t // 128) * 128, hw)
    while t >= 128:
        if hw % t == 0:
            return t
        t -= 128
    return hw


def dwff_forward(inp_feats, params, height=2):
    """inp_feats: list of `height` arrays, each NCHW [B, C, H, W]."""
    assert len(inp_feats) == height
    B, C, H, W = inp_feats[0].shape
    HW = H * W
    dtype = inp_feats[0].dtype

    # Metadata-only reshape: keep native NCHW layout, HW on lanes.
    x_list = [f.reshape(B, C, HW) for f in inp_feats]

    T = _choose_hw_tile(HW, C, jnp.dtype(dtype).itemsize, height)
    n_tiles = HW // T
    x_spec = pl.BlockSpec((1, C, T), lambda b, t: (b, 0, t))

    # --- Phase 1: global per-channel sum over branches + spatial (Pallas). ---
    sums = pl.pallas_call(
        functools.partial(pool_sum_kernel, height=height),
        out_shape=jax.ShapeDtypeStruct((B, C, 1), jnp.float32),
        grid_spec=pltpu.PrefetchScalarGridSpec(
            num_scalar_prefetch=0,
            grid=(B, n_tiles),
            in_specs=[x_spec] * height,
            out_specs=pl.BlockSpec((1, C, 1), lambda b, t: (b, 0, 0)),
        ),
        compiler_params=pltpu.CompilerParams(
            dimension_semantics=("parallel", "arbitrary")),
    )(*x_list)

    # --- Phase 2: tiny attention path (O(B*C*d) flops) in plain JAX. ---
    feats_s = sums[:, :, 0] * (1.0 / HW)                  # [B, C]  global avg pool
    z = feats_s @ params["w1"]                            # 1x1 conv  C -> d
    z = z * params["bn_scale"] + params["bn_shift"]       # BatchNorm2d (eval mode)
    z = jnp.where(z >= 0, z, 0.2 * z)                     # LeakyReLU(0.2)
    logits = jnp.einsum("bd,hdc->bhc", z, params["wfc"])  # per-branch 1x1 conv
    attn = jax.nn.softmax(logits, axis=1)                 # softmax over branches
    attn = attn.astype(jnp.float32)[..., None]            # [B, height, C, 1]

    # --- Phase 3: streaming weighted sum (Pallas, 2-D parallel grid). ---
    out = pl.pallas_call(
        functools.partial(combine_kernel, height=height),
        out_shape=jax.ShapeDtypeStruct((B, C, HW), dtype),
        grid_spec=pltpu.PrefetchScalarGridSpec(
            num_scalar_prefetch=0,
            grid=(B, n_tiles),
            in_specs=[pl.BlockSpec((1, height, C, 1), lambda b, t: (b, 0, 0, 0))]
                     + [x_spec] * height,
            out_specs=pl.BlockSpec((1, C, T), lambda b, t: (b, 0, t)),
        ),
        compiler_params=pltpu.CompilerParams(
            dimension_semantics=("parallel", "parallel")),
    )(attn, *x_list)

    return out.reshape(B, C, H, W)


# ----------------------------- reference ----------------------------------- #

def dwff_reference(inp_feats, params, height=2):
    """Pure-JAX reference mirroring the PyTorch forward (eval-mode BN)."""
    x = jnp.stack(inp_feats, axis=1).astype(jnp.float32)  # [B, height, C, H, W]
    feats_u = jnp.sum(x, axis=1)                          # [B, C, H, W]
    feats_s = jnp.mean(feats_u, axis=(2, 3))              # [B, C]
    z = feats_s @ params["w1"]                            # [B, d]
    z = z * params["bn_scale"] + params["bn_shift"]
    z = jnp.where(z >= 0, z, 0.2 * z)
    logits = jnp.einsum("bd,hdc->bhc", z, params["wfc"])  # [B, height, C]
    attn = jax.nn.softmax(logits, axis=1)
    return jnp.sum(x * attn[:, :, :, None, None], axis=1)  # [B, C, H, W]


def make_params(in_channels, height=2, reduction=8, key=jax.random.PRNGKey(0)):
    d = max(int(in_channels / reduction), 4)
    k1, k2, k3, k4 = jax.random.split(key, 4)
    eps = 1e-5
    # conv_du conv weight [d, C, 1, 1] -> transposed to [C, d]
    w1 = 0.1 * jax.random.normal(k1, (in_channels, d), jnp.float32)
    # BatchNorm2d(d) params (eval mode, folded to scale/shift)
    gamma = 1.0 + 0.1 * jax.random.normal(k2, (d,), jnp.float32)
    beta = 0.1 * jax.random.normal(k3, (d,), jnp.float32)
    running_mean = jnp.zeros((d,), jnp.float32)
    running_var = jnp.ones((d,), jnp.float32)
    scale = gamma / jnp.sqrt(running_var + eps)
    shift = beta - running_mean * scale
    # fcs[i] conv weights [C, d, 1, 1] -> transposed to [d, C]
    wfc = 0.1 * jax.random.normal(k4, (height, d, in_channels), jnp.float32)
    return {
        "w1": w1,
        "bn_scale": scale.reshape(1, d),
        "bn_shift": shift.reshape(1, d),
        "wfc": wfc,
    }


if __name__ == "__main__":
    B, C, H, W = 2, 16, 16, 16
    height = 2

    key = jax.random.PRNGKey(0)
    kx0, kx1, kp = jax.random.split(key, 3)
    inp_feats = [
        jax.random.normal(kx0, (B, C, H, W), jnp.float32),
        jax.random.normal(kx1, (B, C, H, W), jnp.float32),
    ]
    params = make_params(C, height=height, reduction=8, key=kp)

    out = jax.block_until_ready(dwff_forward(inp_feats, params, height=height))

    ref = dwff_reference(inp_feats, params, height=height)
    assert out.shape == (B, C, H, W), out.shape
    max_err = float(jnp.max(jnp.abs(out - ref)))
    assert max_err < 1e-4, max_err
    print("KERNEL_OK")
</pallas_src>

<mosaic_0001>
module attributes {stable_mosaic.version = 11 : i64} {
  func.func @pool_sum_kernel(%arg0: i32, %arg1: i32, %arg2: memref<1x16x256xf32, #tpu.memory_space<vmem>>, %arg3: memref<1x16x256xf32, #tpu.memory_space<vmem>>, %arg4: memref<1x16x1xf32, #tpu.memory_space<vmem>>) attributes {dimension_semantics = [#tpu.dimension_semantics<parallel>, #tpu.dimension_semantics<arbitrary>], iteration_bounds = array<i64: 2, 1>, scalar_prefetch = 0 : i64, scratch_operands = 0 : i64, tpu.core_type = #tpu.core_type<tc>, window_params = [{transform_indices = @transform_0, window_bounds = array<i64: 1, 16, 256>}, {transform_indices = @transform_1, window_bounds = array<i64: 1, 16, 256>}, {transform_indices = @transform_2, window_bounds = array<i64: 1, 16, 1>}]} {
    %c0_i32 = arith.constant 0 : i32
    %0 = arith.cmpi eq, %arg1, %c0_i32 : i32
    %1 = arith.extui %0 : i1 to i32
    %c0_i32_0 = arith.constant 0 : i32
    %2 = arith.cmpi ne, %1, %c0_i32_0 : i32
    scf.if %2 {
      %cst_12 = arith.constant 0.000000e+00 : f32
      %16 = vector.broadcast %cst_12 : f32 to vector<1x16x1xf32>
      %c0_13 = arith.constant 0 : index
      %c0_14 = arith.constant 0 : index
      %c0_15 = arith.constant 0 : index
      %17 = vector.load %arg4[%c0_13, %c0_14, %c0_15] : memref<1x16x1xf32, #tpu.memory_space<vmem>>, vector<1x16x1xf32>
      tpu.vector_store %arg4[%c0_13, %c0_14, %c0_15], %16 {strides = array<i32>} : memref<1x16x1xf32, #tpu.memory_space<vmem>>, vector<1x16x1xf32>,
    } else {
    }
    %c0 = arith.constant 0 : index
    %c0_1 = arith.constant 0 : index
    %c0_2 = arith.constant 0 : index
    %3 = vector.load %arg2[%c0, %c0_1, %c0_2] : memref<1x16x256xf32, #tpu.memory_space<vmem>>, vector<1x16x256xf32>
    %4 = vector.shape_cast %3 : vector<1x16x256xf32> to vector<16x256xf32>
    %c0_3 = arith.constant 0 : index
    %c0_4 = arith.constant 0 : index
    %c0_5 = arith.constant 0 : index
    %5 = vector.load %arg3[%c0_3, %c0_4, %c0_5] : memref<1x16x256xf32, #tpu.memory_space<vmem>>, vector<1x16x256xf32>
    %6 = vector.shape_cast %5 : vector<1x16x256xf32> to vector<16x256xf32>
    %7 = arith.addf %4, %6 : vector<16x256xf32>
    %c0_6 = arith.constant 0 : index
    %c0_7 = arith.constant 0 : index
    %c0_8 = arith.constant 0 : index
    %8 = vector.load %arg4[%c0_6, %c0_7, %c0_8] : memref<1x16x1xf32, #tpu.memory_space<vmem>>, vector<1x16x1xf32>
    %9 = vector.shape_cast %8 : vector<1x16x1xf32> to vector<16x1xf32>
    %cst = arith.constant dense<0.000000e+00> : vector<16xf32>
    %10 = vector.multi_reduction <add>, %7, %cst [1] : vector<16x256xf32> to vector<16xf32>
    %11 = vector.shape_cast %10 : vector<16xf32> to vector<16x1xf32>
    %12 = arith.addf %9, %11 : vector<16x1xf32>
    %c0_9 = arith.constant 0 : index
    %c0_10 = arith.constant 0 : index
    %c0_11 = arith.constant 0 : index
    %13 = vector.load %arg4[%c0_9, %c0_10, %c0_11] : memref<1x16x1xf32, #tpu.memory_space<vmem>>, vector<1x16x1xf32>
    %14 = vector.shape_cast %13 : vector<1x16x1xf32> to vector<16x1xf32>
    %15 = vector.shape_cast %12 : vector<16x1xf32> to vector<1x16x1xf32>
    tpu.vector_store %arg4[%c0_9, %c0_10, %c0_11], %15 {strides = array<i32>} : memref<1x16x1xf32, #tpu.memory_space<vmem>>, vector<1x16x1xf32>,
    return
  }
  func.func @transform_0(%arg0: i32, %arg1: i32) -> (i32, i32, i32) {
    %c0_i32 = arith.constant 0 : i32
    %c0_i32_0 = arith.constant 0 : i32
    return %arg0, %c0_i32, %arg1 : i32, i32, i32
  }
  func.func @transform_1(%arg0: i32, %arg1: i32) -> (i32, i32, i32) {
    %c0_i32 = arith.constant 0 : i32
    %c0_i32_0 = arith.constant 0 : i32
    return %arg0, %c0_i32, %arg1 : i32, i32, i32
  }
  func.func @transform_2(%arg0: i32, %arg1: i32) -> (i32, i32, i32) {
    %c0_i32 = arith.constant 0 : i32
    %c0_i32_0 = arith.constant 0 : i32
    %c0_i32_1 = arith.constant 0 : i32
    return %arg0, %c0_i32, %c0_i32_0 : i32, i32, i32
  }
}

</mosaic_0001>

<llo_original>
// kernel: tpu_custom_call.1
$region0: #{tpu_custom_call.1}
  #allocation0 [shape = 'u32[]', space=smem, size = 0x4, offset = 0x4, fixed_abs, tag = 'smem constant byte address 0x4 - core index']
  #allocation1 [shape = 'u32[144,128]{1,0:T(1,128)}', space=vmem, size = 0x12000, scoped, tag = 'internal scratch']
  %s0 = inlined_call_operand.hbm [shape: f32[2,16,256], index: 0, kind: input, shape index: {}]
  %s1 = inlined_call_operand.hbm [shape: f32[2,16,256], index: 1, kind: input, shape index: {}]
  %s2 = inlined_call_operand.vmem [shape: f32[2,16,1], index: 2, kind: output, shape index: {}]
  %s3 = sld [smem:[#allocation0]]
  $region53: #{tpu_custom_call.1} parent=0
    _
  %s5 = ssub.s32 1, %s3
  %s6 = scalar_select 0, %s5, %s3
  $region1: #{tpu_custom_call.1} parent=0
    #allocation2 [shape = 'u8[32768]{0}', space=vmem, size = 0x8000, scoped, tag = 'input window, operand 0']
    #allocation3 [shape = 's32[2]{0}', space=sflag, size = 0x8, scoped, tag = 'scoped memory for tpu_custom_call.1']
    #allocation4 [shape = 'u8[32768]{0}', space=vmem, size = 0x8000, scoped, tag = 'input window, operand 1']
    #allocation5 [shape = 's32[2]{0}', space=sflag, size = 0x8, scoped, tag = 'scoped memory for tpu_custom_call.1']
    %7 = vsyncpa [#allocation3], 0
    %s8 = scalar_lea.sflag [#allocation3], 1
    %9 = vsyncpa %s8, 0
    %10 = vsyncpa [#allocation5], 0
    %s11 = scalar_lea.sflag [#allocation5], 1
    %12 = vsyncpa %s11, 0
    loop: start=0, step=1, limit=4
    $region2: #{tpu_custom_call.1} parent=1 // loop_pre_header
      _
    $region3: #{tpu_custom_call.1} parent=1 // loop_header
      %s14 = sphi 0, %s18
      %p15 = scmp.ge.s32.totalorder %s14, 4
      %s21 = sphi 0, %s33
      %s22 = sphi 0, %s29
      %s23 = sphi 0, %s21
      %s24 = sphi 0, %s22
      %s25 = sphi 0, %s23
      %s26 = sphi 0, %s24
      %s38 = sphi 0, %s40
      %s41 = sphi 0, %s38
      %s42 = sphi 0, %s41
      %s58 = sphi 0, %s42
      %s66 = sphi 0, %s68
      %s69 = sphi 0, %s66
      %s70 = sphi 0, %s69
      %s86 = sphi 0, %s70
      %s92 = sphi 0, %s94
      %s95 = sphi 0, %s92
      %s96 = sphi 0, %s95
      %s112 = sphi 0, %s96
    $region4: #{tpu_custom_call.1} parent=1 // loop_header_branch
      %17 = sbr.rel (%p15) target = $region8
    $region5: #{tpu_custom_call.1} parent=1 // loop_body
      %s19 = ssub.s32 %s14, 1
      %s20 = ssub.s32 %s14, 2
      %s27 = sadd.s32 1, %s22
      %p28 = scmp.ge.s32.totalorder %s27, 1
      %s29 = scalar_select %p28, 0, %s27
      %s30 = sadd.s32 1, %s21
      %s31 = scalar_select %p28, %s30, %s21
      %p32 = scmp.ge.s32.totalorder %s31, 2
      %s33 = scalar_select %p32, 0, %s31
      %s34 = ssub.s32 %s21, %s33
      %s35 = ssub.s32 %s22, %s29
      %s36 = sor.u32 %s34, %s35
      %p37 = scmp.eq.s32.totalorder %s36, 0
      %s39 = sadd.s32 %s38, 1
      %s40 = scalar_select %p37, %s38, %s39
      %p43 = pneg %p37
      %p44 = scmp.eq.s32.totalorder %s14, 1
      %p45 = por %p43, %p44
      %p46 = scmp.ne.s32.totalorder %s38, %s41
      %p47 = scmp.eq.s32.totalorder %s14, 0
      %p48 = por %p46, %p47
      %p49 = scmp.ne.s32.totalorder %s38, %s41
      %p50 = scmp.eq.s32.totalorder %s19, 1
      %p51 = por %p49, %p50
      %p52 = scmp.ne.s32.totalorder %s41, %s42
      %p53 = scmp.eq.s32.totalorder %s19, 0
      %p54 = por %p52, %p53
      %p55 = scmp.ne.s32.totalorder %s41, %s42
      %p56 = scmp.eq.s32.totalorder %s20, 1
      %p57 = por %p55, %p56
      %p59 = scmp.ne.s32.totalorder %s42, %s58
      %p60 = scmp.eq.s32.totalorder %s20, 0
      %p61 = por %p59, %p60
      %s62 = ssub.s32 %s21, %s33
      %s63 = ssub.s32 %s22, %s29
      %s64 = sor.u32 %s62, %s63
      %p65 = scmp.eq.s32.totalorder %s64, 0
      %s67 = sadd.s32 %s66, 1
      %s68 = scalar_select %p65, %s66, %s67
      %p71 = pneg %p65
      %p72 = scmp.eq.s32.totalorder %s14, 1
      %p73 = por %p71, %p72
      %p74 = scmp.ne.s32.totalorder %s66, %s69
      %p75 = scmp.eq.s32.totalorder %s14, 0
      %p76 = por %p74, %p75
      %p77 = scmp.ne.s32.totalorder %s66, %s69
      %p78 = scmp.eq.s32.totalorder %s19, 1
      %p79 = por %p77, %p78
      %p80 = scmp.ne.s32.totalorder %s69, %s70
      %p81 = scmp.eq.s32.totalorder %s19, 0
      %p82 = por %p80, %p81
      %p83 = scmp.ne.s32.totalorder %s69, %s70
      %p84 = scmp.eq.s32.totalorder %s20, 1
      %p85 = por %p83, %p84
      %p87 = scmp.ne.s32.totalorder %s70, %s86
      %p88 = scmp.eq.s32.totalorder %s20, 0
      %p89 = por %p87, %p88
      %s90 = ssub.s32 %s21, %s33
      %p91 = scmp.eq.s32.totalorder %s90, 0
      %s93 = sadd.s32 %s92, 1
      %s94 = scalar_select %p91, %s92, %s93
      %p97 = pneg %p91
      %p98 = scmp.eq.s32.totalorder %s14, 1
      %p99 = por %p97, %p98
      %p100 = scmp.ne.s32.totalorder %s92, %s95
      %p101 = scmp.eq.s32.totalorder %s14, 0
      %p102 = por %p100, %p101
      %p103 = scmp.ne.s32.totalorder %s92, %s95
      %p104 = scmp.eq.s32.totalorder %s19, 1
      %p105 = por %p103, %p104
      %p106 = scmp.ne.s32.totalorder %s95, %s96
      %p107 = scmp.eq.s32.totalorder %s19, 0
      %p108 = por %p106, %p107
      %p109 = scmp.ne.s32.totalorder %s95, %s96
      %p110 = scmp.eq.s32.totalorder %s20, 1
      %p111 = por %p109, %p110
      %p113 = scmp.ne.s32.totalorder %s96, %s112
      %p114 = scmp.eq.s32.totalorder %s20, 0
      %p115 = por %p113, %p114
      %p116 = scmp.le.s32.totalorder 1, %s14
      %p117 = scmp.lt.s32.totalorder %s14, 3
      %p118 = pnand %p116, %p117
      %p119 = pneg %p118
      // Predicated region
      $region9: #{tpu_custom_call.1} parent=5 // pred_check
        _
      $region10: #{tpu_custom_call.1} parent=5 // pred_check_branch
        %121 = sbr.rel (%p118) target = $region12
      $region11: #{tpu_custom_call.1} parent=5 // pred_region
        %s122 = ssub.s32 %s14, 1
      $region12: #{tpu_custom_call.1} parent=5 // pred_fallthru
        _
      %p123 = scmp.lt.s32.totalorder %s14, 2
      // Predicated region
      $region13: #{tpu_custom_call.1} parent=5 // pred_check
        %p124 = pneg %p123
      $region14: #{tpu_custom_call.1} parent=5 // pred_check_branch
        %126 = sbr.rel (%p124) target = $region16
      $region15: #{tpu_custom_call.1} parent=5 // pred_region
        // Predicated region
        $region17: #{tpu_custom_call.1} parent=15 // pred_check
          %p127 = pneg %p48
        $region18: #{tpu_custom_call.1} parent=15 // pred_check_branch
          %129 = sbr.rel (%p127) target = $region20
        $region19: #{tpu_custom_call.1} parent=15 // pred_region
          %s130 = sand.u32 %s38, 1
          %s131 = scalar_lea.sflag [#allocation3], %s130
          %s132 = sand.u32 %s38, 1
          %s133 = smul.addr %s132, 32
          %s134 = scalar_lea.vmem [#allocation2], %s133
          %s135 = smul.u32 2, %s22
          %s137 = ssub.s32 512, 512
          %138 = vsyncadd %s131, %s137
          %s139 = smul.addr %s21, 4
          %s140 = sadd.s32 %s135, %s139
          %s141 = smul.addr %s140, 128
          %s142 = scalar_lea.hbm %s0, %s141
          %s143 = sshll.u32 %s134, 4
          %s144 = int_to_ptr.vmem [resolvable:$true] %s143
          %149 = dma.hbm_to_vmem [thread:$0]  %s142, 512, %s144, %s131, 256, 256, 16
        $region20: #{tpu_custom_call.1} parent=15 // pred_fallthru
          _
        // Predicated region
        $region21: #{tpu_custom_call.1} parent=15 // pred_check
          %p150 = pneg %p76
        $region22: #{tpu_custom_call.1} parent=15 // pred_check_branch
          %152 = sbr.rel (%p150) target = $region24
        $region23: #{tpu_custom_call.1} parent=15 // pred_region
          %s153 = sand.u32 %s66, 1
          %s154 = scalar_lea.sflag [#allocation5], %s153
          %s155 = sand.u32 %s66, 1
          %s156 = smul.addr %s155, 32
          %s157 = scalar_lea.vmem [#allocation4], %s156
          %s158 = smul.u32 2, %s22
          %s160 = ssub.s32 512, 512
          %161 = vsyncadd %s154, %s160
          %s162 = smul.addr %s21, 4
          %s163 = sadd.s32 %s158, %s162
          %s164 = smul.addr %s163, 128
          %s165 = scalar_lea.hbm %s1, %s164
          %s166 = sshll.u32 %s157, 4
          %s167 = int_to_ptr.vmem [resolvable:$true] %s166
          %172 = dma.hbm_to_vmem [thread:$0]  %s165, 512, %s167, %s154, 256, 256, 16
        $region24: #{tpu_custom_call.1} parent=15 // pred_fallthru
          _
      $region16: #{tpu_custom_call.1} parent=5 // pred_fallthru
        _
      %p173 = scmp.le.s32.totalorder 1, %s14
      %p174 = scmp.lt.s32.totalorder %s14, 3
      %p175 = pnand %p173, %p174
      %p176 = pneg %p175
      // Predicated region
      $region25: #{tpu_custom_call.1} parent=5 // pred_check
        _
      $region26: #{tpu_custom_call.1} parent=5 // pred_check_branch
        %178 = sbr.rel (%p175) target = $region28
      $region27: #{tpu_custom_call.1} parent=5 // pred_region
        %s179 = ssub.s32 %s14, 1
        %s180 = sand.u32 %s41, 1
        %s181 = scalar_lea.sflag [#allocation3], %s180
        %s182 = sand.u32 %s41, 1
        %s183 = smul.addr %s182, 32
        %s184 = scalar_lea.vmem [#allocation2], %s183
        // Predicated region
        $region29: #{tpu_custom_call.1} parent=27 // pred_check
          %p185 = pneg %p54
        $region30: #{tpu_custom_call.1} parent=27 // pred_check_branch
          %187 = sbr.rel (%p185) target = $region32
        $region31: #{tpu_custom_call.1} parent=27 // pred_region
          %188 = dma.done %s181, 512
        $region32: #{tpu_custom_call.1} parent=27 // pred_fallthru
          _
        %s189 = sand.u32 %s69, 1
        %s190 = scalar_lea.sflag [#allocation5], %s189
        %s191 = sand.u32 %s69, 1
        %s192 = smul.addr %s191, 32
        %s193 = scalar_lea.vmem [#allocation4], %s192
        // Predicated region
        $region33: #{tpu_custom_call.1} parent=27 // pred_check
          %p194 = pneg %p82
        $region34: #{tpu_custom_call.1} parent=27 // pred_check_branch
          %196 = sbr.rel (%p194) target = $region36
        $region35: #{tpu_custom_call.1} parent=27 // pred_region
          %197 = dma.done %s190, 512
        $region36: #{tpu_custom_call.1} parent=27 // pred_fallthru
          _
        %s198 = sand.u32 %s41, 1
        %s199 = scalar_lea.sflag [#allocation3], %s198
        %s200 = sand.u32 %s41, 1
        %s201 = smul.addr %s200, 32
        %s202 = scalar_lea.vmem [#allocation2], %s201
        %p203 = pneg %p54
        %p204 = pneg %p51
        %s205 = sand.u32 %s69, 1
        %s206 = scalar_lea.sflag [#allocation5], %s205
        %s207 = sand.u32 %s69, 1
        %s208 = smul.addr %s207, 32
        %s209 = scalar_lea.vmem [#allocation4], %s208
        %p210 = pneg %p82
        %p211 = pneg %p79
        %p212 = pneg %p108
        %p213 = pneg %p105
        %p214 = scmp.lt.s32.totalorder %s23, 1
        %s215 = scalar_select %p214, %s23, 1
        %s216 = smul.addr %s215, 2
        %s217 = smul.addr %s216, 8
        %s218 = scalar_lea.vmem %s2, %s217
        %s219 = smul.u32 2, %s24
        %s220 = smul.u32 2, %s24
        %p221 = scmp.lt.s32.totalorder %s23, 1
        %s222 = scalar_select %p221, %s23, 1
        %s223 = smul.addr %s222, 2
        %s224 = smul.addr %s223, 8
        %s225 = scalar_lea.vmem %s2, %s224
        %p226 = scmp.eq.s32.totalorder %s24, 0
        // Predicated region
        $region37: #{tpu_custom_call.1} parent=27 // pred_check
          %p227 = pneg %p226
        $region38: #{tpu_custom_call.1} parent=27 // pred_check_branch
          %229 = sbr.rel (%p227) target = $region40
        $region39: #{tpu_custom_call.1} parent=27 // pred_region
          %vm230 = vcmask 7168
          %231 = vst.msk [vmem:[%s225] sm:$0xff] %vm230, 0.0
          %232 = vst.msk [vmem:[%s225 + $0x8] sm:$0xff] %vm230, 0.0
        $region40: #{tpu_custom_call.1} parent=27 // pred_fallthru
          _
        %v233 = vld [vmem:[%s184] sm:$0xff]
        %v234 = vld [vmem:[%s184 + $0x8] sm:$0xff]
        %v235 = vld [vmem:[%s184 + $0x10] sm:$0xff]
        %v236 = vld [vmem:[%s184 + $0x18] sm:$0xff]
        %v237 = vld [vmem:[%s193] sm:$0xff]
        %v238 = vld [vmem:[%s193 + $0x8] sm:$0xff]
        %v239 = vld [vmem:[%s193 + $0x10] sm:$0xff]
        %v240 = vld [vmem:[%s193 + $0x18] sm:$0xff]
        %v241 = vadd.f32 %v233, %v237
        %v242 = vadd.f32 %v234, %v238
        %v243 = vadd.f32 %v235, %v239
        %v244 = vadd.f32 %v236, %v240
        %v245 = vld [vmem:[%s225] sm:$0xff]
        %v246 = vld [vmem:[%s225 + $0x8] sm:$0xff]
        %v247 = vadd.f32 %v241, %v242
        %248 = vadd.xlane.f32.xlu0 %v247
        %v249 = vpop.xlane.xlu0 %248
        %v250 = vadd.f32 %v243, %v244
        %251 = vadd.xlane.f32.xlu0 %v250
        %v252 = vpop.xlane.xlu0 %251
        %v253 = vadd.f32 %v245, %v249
        %v254 = vadd.f32 %v246, %v252
        %vm255 = vcmask 7168
        %256 = vst.msk [vmem:[%s225] sm:$0xff] %vm255, %v253
        %257 = vst.msk [vmem:[%s225 + $0x8] sm:$0xff] %vm255, %v254
        %p258 = scmp.lt.s32.totalorder %s23, 1
        %s259 = scalar_select %p258, %s23, 1
        %s260 = smul.addr %s259, 2
        %s261 = smul.addr %s260, 8
        %s262 = scalar_lea.vmem %s2, %s261
        // Predicated region
        $region41: #{tpu_custom_call.1} parent=27 // pred_check
          %p263 = pneg %p105
        $region42: #{tpu_custom_call.1} parent=27 // pred_check_branch
          %265 = sbr.rel (%p263) target = $region44
        $region43: #{tpu_custom_call.1} parent=27 // pred_region
          _
        $region44: #{tpu_custom_call.1} parent=27 // pred_fallthru
          _
      $region28: #{tpu_custom_call.1} parent=5 // pred_fallthru
        _
      %p266 = scmp.le.s32.totalorder 2, %s14
      // Predicated region
      $region45: #{tpu_custom_call.1} parent=5 // pred_check
        %p267 = pneg %p266
      $region46: #{tpu_custom_call.1} parent=5 // pred_check_branch
        %269 = sbr.rel (%p267) target = $region48
      $region47: #{tpu_custom_call.1} parent=5 // pred_region
        %s270 = ssub.s32 %s14, 2
        // Predicated region
        $region49: #{tpu_custom_call.1} parent=47 // pred_check
          %p271 = pneg %p111
        $region50: #{tpu_custom_call.1} parent=47 // pred_check_branch
          %273 = sbr.rel (%p271) target = $region52
        $region51: #{tpu_custom_call.1} parent=47 // pred_region
          %p274 = scmp.lt.s32.totalorder %s25, 1
          %s275 = scalar_select %p274, %s25, 1
          %s276 = smul.addr %s275, 2
          %s277 = smul.addr %s276, 8
          %s278 = scalar_lea.vmem %s2, %s277
        $region52: #{tpu_custom_call.1} parent=47 // pred_fallthru
          _
      $region48: #{tpu_custom_call.1} parent=5 // pred_fallthru
        _
    $region6: #{tpu_custom_call.1} parent=1 // loop_footer
      %s18 = sadd.s32 1, %s14
    $region7: #{tpu_custom_call.1} parent=1 // loop_footer_branch
      %13 = sbr.rel target = $region3
    $region8: #{tpu_custom_call.1} parent=1 // loop_exit
      _
    %279 = vsyncpa [#allocation3], 1
    %s280 = scalar_lea.sflag [#allocation3], 1
    %281 = vsyncpa %s280, 1
    %282 = vsyncpa [#allocation5], 1
    %s283 = scalar_lea.sflag [#allocation5], 1
    %284 = vsyncpa %s283, 1

</llo_original>
